<compile_context>
chip_gen: v5e
topology: v5e:2x2
jax: 0.10.0
libtpu: 0.0.40
codegen_flags: <defaults>
</compile_context>

<pallas_src>
import jax
import jax.numpy as jnp
from jax import lax
from jax.experimental import pallas as pl
from jax.experimental.pallas import tpu as pltpu

EPS = 1e-10


def _feature_map(x):
    # fm(None) default for linear attention: elu(x) + 1  ==  x + 1 (x > 0) else exp(x).
    return jnp.where(x > 0, x + 1.0, jnp.exp(x))


def _causal_linear_attn_kernel(q_ref, k_ref, v_ref, o_ref, s_ref, ksum_ref):
    # Blocks are (1, T, H, D): one batch element, one sequence chunk, all heads.
    # Scratch (persists across the chunk grid axis):
    #   s_ref    : (H, D, D) f32, S[h, d, m] = sum_{j < chunk_start} K[j,h,d] V[j,h,m]
    #   ksum_ref : (H, D)    f32, running sum of K over all previous chunks.
    chunk = pl.program_id(1)

    @pl.when(chunk == 0)
    def _():
        s_ref[...] = jnp.zeros_like(s_ref)
        ksum_ref[...] = jnp.zeros_like(ksum_ref)

    # Feature map in f32, then go head-major (H, T, D) inside VMEM.
    q = _feature_map(q_ref[0].astype(jnp.float32))            # (T, H, D)
    k = _feature_map(k_ref[0].astype(jnp.float32))
    v = v_ref[0].astype(jnp.float32)
    qh = jnp.transpose(q, (1, 0, 2))                           # (H, T, D)
    kh = jnp.transpose(k, (1, 0, 2))
    vh = jnp.transpose(v, (1, 0, 2))

    # bf16 operands for the MXU, f32 accumulation.
    qb = qh.astype(jnp.bfloat16)
    kb = kh.astype(jnp.bfloat16)
    vb = vh.astype(jnp.bfloat16)

    S_prev = s_ref[...]                                        # (H, D, D) f32
    ksum_prev = ksum_ref[...]                                  # (H, D)    f32

    H, T, _ = qh.shape

    # Intra-chunk causal scores: contract the feature dim of both operands directly.
    s = jnp.einsum('htd,hsd->hts', qb, kb,
                   preferred_element_type=jnp.float32)         # (H, T, T)
    row = lax.broadcasted_iota(jnp.int32, (T, T), 0)
    col = lax.broadcasted_iota(jnp.int32, (T, T), 1)
    s = jnp.where((row >= col)[None, :, :], s, 0.0)

    # Numerator: history (q @ S_prev) + intra-chunk (masked scores @ v).
    inter_num = jnp.einsum('htd,hdm->htm', qb, S_prev.astype(jnp.bfloat16),
                           preferred_element_type=jnp.float32)     # (H, T, D)
    intra_num = jnp.einsum('hts,hsd->htd', s.astype(jnp.bfloat16), vb,
                           preferred_element_type=jnp.float32)     # (H, T, D)

    # Denominator: Q_i . cumsum(K)_i = Q_i . ksum_prev + sum_{j<=i in chunk} Q_i . K_j
    inter_den = jnp.sum(qh * ksum_prev[:, None, :], axis=-1)       # (H, T)
    denom = inter_den + jnp.sum(s, axis=-1) + EPS                  # (H, T)

    out_h = (inter_num + intra_num) * pl.reciprocal(denom, approx=True)[:, :, None]
    o_ref[0] = jnp.transpose(out_h, (1, 0, 2)).astype(o_ref.dtype)

    # Carry the state to the next chunk (kept in f32).
    s_ref[...] = S_prev + jnp.einsum('hsd,hsm->hdm', kb, vb,
                                     preferred_element_type=jnp.float32)
    ksum_ref[...] = ksum_prev + jnp.sum(kh, axis=1)


def causal_linear_attention(queries, keys, values, *, chunk_size=128):
    """queries/keys/values: (N, L, H, D). Returns (V_out, None) like the module forward
    (output_attention=False path)."""
    N, L, H, D = queries.shape

    # Largest chunk <= chunk_size that divides L (a real deployment would pad L instead).
    T = min(chunk_size, L)
    while L % T:
        T -= 1
    num_chunks = L // T

    spec = pl.BlockSpec((1, T, H, D), lambda n, l: (n, l, 0, 0))

    out = pl.pallas_call(
        _causal_linear_attn_kernel,
        out_shape=jax.ShapeDtypeStruct((N, L, H, D), queries.dtype),
        grid_spec=pltpu.PrefetchScalarGridSpec(
            num_scalar_prefetch=0,
            grid=(N, num_chunks),              # state-carrying chunk axis last
            in_specs=[spec, spec, spec],
            out_specs=spec,
            scratch_shapes=[
                pltpu.VMEM((H, D, D), jnp.float32),   # running S state
                pltpu.VMEM((H, D), jnp.float32),      # running K-sum
            ],
        ),
        compiler_params=pltpu.CompilerParams(
            dimension_semantics=("parallel", "arbitrary"),
            vmem_limit_bytes=32 * 1024 * 1024,
        ),
    )(queries, keys, values)
    return out, None


def _reference_linear(queries, keys, values):
    """Pure-JAX transcription of the PyTorch _linear loop (for validation)."""
    Q = _feature_map(queries)
    K = _feature_map(keys)
    V = values
    Z = 1.0 / (jnp.einsum('nlhi,nlhi->nlh', Q, jnp.cumsum(K, axis=1)) + EPS)
    N, L, H, D = Q.shape

    def step(S, inputs):
        k_i, v_i, q_i = inputs  # each (N, H, D)
        S = S + jnp.einsum('nhd,nhm->nhmd', k_i, v_i)
        out_i = jnp.einsum('nhd,nhmd->nhm', q_i, S)
        return S, out_i

    S0 = jnp.zeros((N, H, D, D), dtype=jnp.float32)
    ks = jnp.transpose(K, (1, 0, 2, 3))
    vs = jnp.transpose(V, (1, 0, 2, 3))
    qs = jnp.transpose(Q, (1, 0, 2, 3))
    _, outs = lax.scan(step, S0, (ks, vs, qs))
    V_ = jnp.transpose(outs, (1, 0, 2, 3))  # (N, L, H, D)
    return jnp.einsum('nlhm,nlh->nlhm', V_, Z)


if __name__ == "__main__":
    key = jax.random.PRNGKey(0)
    kq, kk, kv = jax.random.split(key, 3)

    N, L, H, D = 2, 8, 2, 32  # batch, seq, heads, hidden
    queries = jax.random.normal(kq, (N, L, H, D), dtype=jnp.float32)
    keys_ = jax.random.normal(kk, (N, L, H, D), dtype=jnp.float32)
    values = jax.random.normal(kv, (N, L, H, D), dtype=jnp.float32)

    ref = _reference_linear(queries, keys_, values)

    # Run single-chunk and multi-chunk (the latter exercises the carried S / K-sum state).
    for cs in (L, 4):
        out, attn = causal_linear_attention(queries, keys_, values, chunk_size=cs)
        out = jax.block_until_ready(out)
        assert out.shape == (N, L, H, D)
        assert attn is None
        # bf16 MXU operands (f32 accumulation) + approx reciprocal -> loose tolerance vs f32 ref.
        assert jnp.allclose(out, ref, atol=5e-2, rtol=5e-2), f"mismatch vs reference (chunk={cs})"

    print("KERNEL_OK")
</pallas_src>

<mosaic_0001>
module attributes {stable_mosaic.version = 11 : i64} {
  func.func @_causal_linear_attn_kernel(%arg0: i32, %arg1: i32, %arg2: memref<1x8x2x32xf32, #tpu.memory_space<vmem>>, %arg3: memref<1x8x2x32xf32, #tpu.memory_space<vmem>>, %arg4: memref<1x8x2x32xf32, #tpu.memory_space<vmem>>, %arg5: memref<1x8x2x32xf32, #tpu.memory_space<vmem>>, %arg6: memref<2x32x32xf32, #tpu.memory_space<vmem>>, %arg7: memref<2x32xf32, #tpu.memory_space<vmem>>) attributes {dimension_semantics = [#tpu.dimension_semantics<parallel>, #tpu.dimension_semantics<arbitrary>], iteration_bounds = array<i64: 2, 1>, scalar_prefetch = 0 : i64, scratch_operands = 2 : i64, tpu.core_type = #tpu.core_type<tc>, window_params = [{transform_indices = @transform_0, window_bounds = array<i64: 1, 8, 2, 32>}, {transform_indices = @transform_1, window_bounds = array<i64: 1, 8, 2, 32>}, {transform_indices = @transform_2, window_bounds = array<i64: 1, 8, 2, 32>}, {transform_indices = @transform_3, window_bounds = array<i64: 1, 8, 2, 32>}]} {
    %c0_i32 = arith.constant 0 : i32
    %0 = arith.cmpi eq, %arg1, %c0_i32 : i32
    %1 = arith.extui %0 : i1 to i32
    %c0_i32_0 = arith.constant 0 : i32
    %2 = arith.cmpi ne, %1, %c0_i32_0 : i32
    scf.if %2 {
      %cst_38 = arith.constant 0.000000e+00 : f32
      %65 = vector.broadcast %cst_38 : f32 to vector<2x32x32xf32>
      %c0_39 = arith.constant 0 : index
      %c0_40 = arith.constant 0 : index
      %c0_41 = arith.constant 0 : index
      %66 = vector.load %arg6[%c0_39, %c0_40, %c0_41] : memref<2x32x32xf32, #tpu.memory_space<vmem>>, vector<2x32x32xf32>
      tpu.vector_store %arg6[%c0_39, %c0_40, %c0_41], %65 {strides = array<i32>} : memref<2x32x32xf32, #tpu.memory_space<vmem>>, vector<2x32x32xf32>,
      %cst_42 = arith.constant 0.000000e+00 : f32
      %67 = vector.broadcast %cst_42 : f32 to vector<2x32xf32>
      %c0_43 = arith.constant 0 : index
      %c0_44 = arith.constant 0 : index
      %68 = vector.load %arg7[%c0_43, %c0_44] : memref<2x32xf32, #tpu.memory_space<vmem>>, vector<2x32xf32>
      tpu.vector_store %arg7[%c0_43, %c0_44], %67 {strides = array<i32>} : memref<2x32xf32, #tpu.memory_space<vmem>>, vector<2x32xf32>,
    } else {
    }
    %c0 = arith.constant 0 : index
    %c0_1 = arith.constant 0 : index
    %c0_2 = arith.constant 0 : index
    %c0_3 = arith.constant 0 : index
    %3 = vector.load %arg2[%c0, %c0_1, %c0_2, %c0_3] : memref<1x8x2x32xf32, #tpu.memory_space<vmem>>, vector<1x8x2x32xf32>
    %4 = vector.shape_cast %3 : vector<1x8x2x32xf32> to vector<8x2x32xf32>
    %cst = arith.constant 0.000000e+00 : f32
    %5 = vector.broadcast %cst : f32 to vector<8x2x32xf32>
    %6 = arith.cmpf ogt, %4, %5 : vector<8x2x32xf32>
    %cst_4 = arith.constant 1.000000e+00 : f32
    %7 = vector.broadcast %cst_4 : f32 to vector<8x2x32xf32>
    %8 = arith.addf %4, %7 : vector<8x2x32xf32>
    %9 = math.exp %4 : vector<8x2x32xf32>
    %10 = arith.select %6, %8, %9 : vector<8x2x32xi1>, vector<8x2x32xf32>
    %c0_5 = arith.constant 0 : index
    %c0_6 = arith.constant 0 : index
    %c0_7 = arith.constant 0 : index
    %c0_8 = arith.constant 0 : index
    %11 = vector.load %arg3[%c0_5, %c0_6, %c0_7, %c0_8] : memref<1x8x2x32xf32, #tpu.memory_space<vmem>>, vector<1x8x2x32xf32>
    %12 = vector.shape_cast %11 : vector<1x8x2x32xf32> to vector<8x2x32xf32>
    %cst_9 = arith.constant 0.000000e+00 : f32
    %13 = vector.broadcast %cst_9 : f32 to vector<8x2x32xf32>
    %14 = arith.cmpf ogt, %12, %13 : vector<8x2x32xf32>
    %cst_10 = arith.constant 1.000000e+00 : f32
    %15 = vector.broadcast %cst_10 : f32 to vector<8x2x32xf32>
    %16 = arith.addf %12, %15 : vector<8x2x32xf32>
    %17 = math.exp %12 : vector<8x2x32xf32>
    %18 = arith.select %14, %16, %17 : vector<8x2x32xi1>, vector<8x2x32xf32>
    %c0_11 = arith.constant 0 : index
    %c0_12 = arith.constant 0 : index
    %c0_13 = arith.constant 0 : index
    %c0_14 = arith.constant 0 : index
    %19 = vector.load %arg4[%c0_11, %c0_12, %c0_13, %c0_14] : memref<1x8x2x32xf32, #tpu.memory_space<vmem>>, vector<1x8x2x32xf32>
    %20 = vector.shape_cast %19 : vector<1x8x2x32xf32> to vector<8x2x32xf32>
    %21 = tpu.transpose %10, [1, 0, 2] : vector<8x2x32xf32> -> vector<2x8x32xf32>
    %22 = tpu.transpose %18, [1, 0, 2] : vector<8x2x32xf32> -> vector<2x8x32xf32>
    %23 = tpu.transpose %20, [1, 0, 2] : vector<8x2x32xf32> -> vector<2x8x32xf32>
    %24 = arith.truncf %21 : vector<2x8x32xf32> to vector<2x8x32xbf16>
    %25 = arith.truncf %22 : vector<2x8x32xf32> to vector<2x8x32xbf16>
    %26 = arith.truncf %23 : vector<2x8x32xf32> to vector<2x8x32xbf16>
    %c0_15 = arith.constant 0 : index
    %c0_16 = arith.constant 0 : index
    %c0_17 = arith.constant 0 : index
    %27 = vector.load %arg6[%c0_15, %c0_16, %c0_17] : memref<2x32x32xf32, #tpu.memory_space<vmem>>, vector<2x32x32xf32>
    %c0_18 = arith.constant 0 : index
    %c0_19 = arith.constant 0 : index
    %28 = vector.load %arg7[%c0_18, %c0_19] : memref<2x32xf32, #tpu.memory_space<vmem>>, vector<2x32xf32>
    "tpu.trace_start"() <{level = 10 : i32, message = "htd,hsd->hts"}> : () -> ()
    %cst_20 = arith.constant dense<0.000000e+00> : vector<2x8x8xf32>
    %29 = tpu.matmul %24, %25, %cst_20 {dimension_numbers = #tpu.dot_dimension_numbers<[2], [2], [1], [1], [0, 0, 0, 1, 1, 1], [0], [0]>} : vector<2x8x32xbf16>, vector<2x8x32xbf16>, vector<2x8x8xf32> -> vector<2x8x8xf32>
    "tpu.trace_stop"() : () -> ()
    %30 = tpu.iota {dimensions = array<i32: 0>} : vector<8x8xi32>
    %31 = tpu.iota {dimensions = array<i32: 1>} : vector<8x8xi32>
    %32 = arith.cmpi sge, %30, %31 : vector<8x8xi32>
    %33 = vector.shape_cast %32 : vector<8x8xi1> to vector<1x8x8xi1>
    %cst_21 = arith.constant 0.000000e+00 : f32
    %34 = vector.shape_cast %33 : vector<1x8x8xi1> to vector<1x8x8xi1>
    %35 = vector.broadcast %34 : vector<1x8x8xi1> to vector<2x8x8xi1>
    %36 = vector.broadcast %cst_21 : f32 to vector<2x8x8xf32>
    %37 = arith.select %35, %29, %36 : vector<2x8x8xi1>, vector<2x8x8xf32>
    %38 = arith.truncf %27 : vector<2x32x32xf32> to vector<2x32x32xbf16>
    "tpu.trace_start"() <{level = 10 : i32, message = "htd,hdm->htm"}> : () -> ()
    %cst_22 = arith.constant dense<0.000000e+00> : vector<2x8x32xf32>
    %39 = tpu.matmul %24, %38, %cst_22 {dimension_numbers = #tpu.dot_dimension_numbers<[2], [1], [1], [2], [0, 0, 0, 1, 1, 2], [0], [0]>} : vector<2x8x32xbf16>, vector<2x32x32xbf16>, vector<2x8x32xf32> -> vector<2x8x32xf32>
    "tpu.trace_stop"() : () -> ()
    %40 = arith.truncf %37 : vector<2x8x8xf32> to vector<2x8x8xbf16>
    "tpu.trace_start"() <{level = 10 : i32, message = "hts,hsd->htd"}> : () -> ()
    %cst_23 = arith.constant dense<0.000000e+00> : vector<2x8x32xf32>
    %41 = tpu.matmul %40, %26, %cst_23 {dimension_numbers = #tpu.dot_dimension_numbers<[2], [1], [1], [2], [0, 0, 0, 1, 1, 2], [0], [0]>} : vector<2x8x8xbf16>, vector<2x8x32xbf16>, vector<2x8x32xf32> -> vector<2x8x32xf32>
    "tpu.trace_stop"() : () -> ()
    %42 = vector.shape_cast %28 : vector<2x32xf32> to vector<2x1x32xf32>
    %43 = vector.broadcast %42 : vector<2x1x32xf32> to vector<2x8x32xf32>
    %44 = arith.mulf %21, %43 : vector<2x8x32xf32>
    %cst_24 = arith.constant dense<0.000000e+00> : vector<2x8xf32>
    %45 = vector.multi_reduction <add>, %44, %cst_24 [2] : vector<2x8x32xf32> to vector<2x8xf32>
    %cst_25 = arith.constant dense<0.000000e+00> : vector<2x8xf32>
    %46 = vector.multi_reduction <add>, %37, %cst_25 [2] : vector<2x8x8xf32> to vector<2x8xf32>
    %47 = arith.addf %45, %46 : vector<2x8xf32>
    %cst_26 = arith.constant 1.000000e-10 : f32
    %48 = vector.broadcast %cst_26 : f32 to vector<2x8xf32>
    %49 = arith.addf %47, %48 : vector<2x8xf32>
    %50 = arith.addf %39, %41 : vector<2x8x32xf32>
    %51 = tpu.reciprocal %49 {approx = true} : vector<2x8xf32> -> vector<2x8xf32>
    %52 = vector.shape_cast %51 : vector<2x8xf32> to vector<2x8x1xf32>
    %53 = vector.broadcast %52 : vector<2x8x1xf32> to vector<2x8x32xf32>
    %54 = arith.mulf %50, %53 : vector<2x8x32xf32>
    %55 = tpu.transpose %54, [1, 0, 2] : vector<2x8x32xf32> -> vector<8x2x32xf32>
    %c0_27 = arith.constant 0 : index
    %c0_28 = arith.constant 0 : index
    %c0_29 = arith.constant 0 : index
    %c0_30 = arith.constant 0 : index
    %56 = vector.load %arg5[%c0_27, %c0_28, %c0_29, %c0_30] : memref<1x8x2x32xf32, #tpu.memory_space<vmem>>, vector<1x8x2x32xf32>
    %57 = vector.shape_cast %56 : vector<1x8x2x32xf32> to vector<8x2x32xf32>
    %58 = vector.shape_cast %55 : vector<8x2x32xf32> to vector<1x8x2x32xf32>
    tpu.vector_store %arg5[%c0_27, %c0_28, %c0_29, %c0_30], %58 {strides = array<i32>} : memref<1x8x2x32xf32, #tpu.memory_space<vmem>>, vector<1x8x2x32xf32>,
    "tpu.trace_start"() <{level = 10 : i32, message = "hsd,hsm->hdm"}> : () -> ()
    %cst_31 = arith.constant dense<0.000000e+00> : vector<2x32x32xf32>
    %59 = tpu.matmul %25, %26, %cst_31 {dimension_numbers = #tpu.dot_dimension_numbers<[1], [1], [2], [2], [0, 0, 0, 2, 1, 2], [0], [0]>} : vector<2x8x32xbf16>, vector<2x8x32xbf16>, vector<2x32x32xf32> -> vector<2x32x32xf32>
    "tpu.trace_stop"() : () -> ()
    %60 = arith.addf %27, %59 : vector<2x32x32xf32>
    %c0_32 = arith.constant 0 : index
    %c0_33 = arith.constant 0 : index
    %c0_34 = arith.constant 0 : index
    %61 = vector.load %arg6[%c0_32, %c0_33, %c0_34] : memref<2x32x32xf32, #tpu.memory_space<vmem>>, vector<2x32x32xf32>
    tpu.vector_store %arg6[%c0_32, %c0_33, %c0_34], %60 {strides = array<i32>} : memref<2x32x32xf32, #tpu.memory_space<vmem>>, vector<2x32x32xf32>,
    %cst_35 = arith.constant dense<0.000000e+00> : vector<2x32xf32>
    %62 = vector.multi_reduction <add>, %22, %cst_35 [1] : vector<2x8x32xf32> to vector<2x32xf32>
    %63 = arith.addf %28, %62 : vector<2x32xf32>
    %c0_36 = arith.constant 0 : index
    %c0_37 = arith.constant 0 : index
    %64 = vector.load %arg7[%c0_36, %c0_37] : memref<2x32xf32, #tpu.memory_space<vmem>>, vector<2x32xf32>
    tpu.vector_store %arg7[%c0_36, %c0_37], %63 {strides = array<i32>} : memref<2x32xf32, #tpu.memory_space<vmem>>, vector<2x32xf32>,
    return
  }
  func.func @transform_0(%arg0: i32, %arg1: i32) -> (i32, i32, i32, i32) {
    %c0_i32 = arith.constant 0 : i32
    %c0_i32_0 = arith.constant 0 : i32
    %c0_i32_1 = arith.constant 0 : i32
    return %arg0, %arg1, %c0_i32, %c0_i32_0 : i32, i32, i32, i32
  }
  func.func @transform_1(%arg0: i32, %arg1: i32) -> (i32, i32, i32, i32) {
    %c0_i32 = arith.constant 0 : i32
    %c0_i32_0 = arith.constant 0 : i32
    %c0_i32_1 = arith.constant 0 : i32
    return %arg0, %arg1, %c0_i32, %c0_i32_0 : i32, i32, i32, i32
  }
  func.func @transform_2(%arg0: i32, %arg1: i32) -> (i32, i32, i32, i32) {
    %c0_i32 = arith.constant 0 : i32
    %c0_i32_0 = arith.constant 0 : i32
    %c0_i32_1 = arith.constant 0 : i32
    return %arg0, %arg1, %c0_i32, %c0_i32_0 : i32, i32, i32, i32
  }
  func.func @transform_3(%arg0: i32, %arg1: i32) -> (i32, i32, i32, i32) {
    %c0_i32 = arith.constant 0 : i32
    %c0_i32_0 = arith.constant 0 : i32
    %c0_i32_1 = arith.constant 0 : i32
    return %arg0, %arg1, %c0_i32, %c0_i32_0 : i32, i32, i32, i32
  }
}

</mosaic_0001>

<llo_original>
// kernel: tpu_custom_call.1
$region0: #{tpu_custom_call.1}
  #allocation0 [shape = 'u32[]', space=smem, size = 0x4, offset = 0x4, fixed_abs, tag = 'smem constant byte address 0x4 - core index']
  #allocation1 [shape = 'u32[72,128]{1,0:T(1,128)}', space=vmem, size = 0x9000, scoped, tag = 'internal scratch']
  #allocation2 [shape = 'f32[2,32,32]{2,1,0:T(8,128)}', space=vmem, size = 0x8000, scoped, tag = 'scratch operand']
  #allocation3 [shape = 'f32[2,32]{1,0:T(2,128)}', space=vmem, size = 0x400, scoped, tag = 'scratch operand']
  %s0 = inlined_call_operand.hbm [shape: f32[2,8,2,32], index: 0, kind: input, shape index: {}]
  %s1 = inlined_call_operand.hbm [shape: f32[2,8,2,32], index: 1, kind: input, shape index: {}]
  %s2 = inlined_call_operand.hbm [shape: f32[2,8,2,32], index: 2, kind: input, shape index: {}]
  %s3 = inlined_call_operand.hbm [shape: f32[2,8,2,32], index: 3, kind: output, shape index: {}]
  %s4 = sld [smem:[#allocation0]]
  $region61: #{tpu_custom_call.1} parent=0
    _
  %s6 = ssub.s32 1, %s4
  %s7 = scalar_select 0, %s6, %s4
  $region1: #{tpu_custom_call.1} parent=0
    #allocation4 [shape = 'u8[16384]{0}', space=vmem, size = 0x4000, scoped, tag = 'input window, operand 0']
    #allocation5 [shape = 's32[2]{0}', space=sflag, size = 0x8, scoped, tag = 'scoped memory for tpu_custom_call.1']
    #allocation6 [shape = 's32[2]{0}', space=sflag, size = 0x8, scoped, tag = 'scoped memory for tpu_custom_call.1']
    #allocation7 [shape = 'u8[16384]{0}', space=vmem, size = 0x4000, scoped, tag = 'input window, operand 1']
    #allocation8 [shape = 's32[2]{0}', space=sflag, size = 0x8, scoped, tag = 'scoped memory for tpu_custom_call.1']
    #allocation9 [shape = 'u8[16384]{0}', space=vmem, size = 0x4000, scoped, tag = 'input window, operand 2']
    #allocation10 [shape = 'u8[16384]{0}', space=vmem, size = 0x4000, scoped, tag = 'output window, operand 0']
    %8 = vsyncpa [#allocation5], 0
    %s9 = scalar_lea.sflag [#allocation5], 1
    %10 = vsyncpa %s9, 0
    %11 = vsyncpa [#allocation8], 0
    %s12 = scalar_lea.sflag [#allocation8], 1
    %13 = vsyncpa %s12, 0
    %14 = vsyncpa [#allocation6], 0
    %s15 = scalar_lea.sflag [#allocation6], 1
    %16 = vsyncpa %s15, 0
    loop: start=0, step=1, limit=4
    $region2: #{tpu_custom_call.1} parent=1 // loop_pre_header
      _
    $region3: #{tpu_custom_call.1} parent=1 // loop_header
      %s18 = sphi 0, %s22
      %p19 = scmp.ge.s32.totalorder %s18, 4
      %s25 = sphi 0, %s37
      %s26 = sphi 0, %s33
      %s27 = sphi 0, %s25
      %s28 = sphi 0, %s26
      %s29 = sphi 0, %s27
      %s30 = sphi 0, %s28
      %s42 = sphi 0, %s44
      %s45 = sphi 0, %s42
      %s46 = sphi 0, %s45
      %s62 = sphi 0, %s46
      %s70 = sphi 0, %s72
      %s73 = sphi 0, %s70
      %s74 = sphi 0, %s73
      %s90 = sphi 0, %s74
      %s98 = sphi 0, %s100
      %s101 = sphi 0, %s98
      %s102 = sphi 0, %s101
      %s118 = sphi 0, %s102
      %s126 = sphi 0, %s128
      %s129 = sphi 0, %s126
      %s130 = sphi 0, %s129
      %s146 = sphi 0, %s130
    $region4: #{tpu_custom_call.1} parent=1 // loop_header_branch
      %21 = sbr.rel (%p19) target = $region8
    $region5: #{tpu_custom_call.1} parent=1 // loop_body
      %s23 = ssub.s32 %s18, 1
      %s24 = ssub.s32 %s18, 2
      %s31 = sadd.s32 1, %s26
      %p32 = scmp.ge.s32.totalorder %s31, 1
      %s33 = scalar_select %p32, 0, %s31
      %s34 = sadd.s32 1, %s25
      %s35 = scalar_select %p32, %s34, %s25
      %p36 = scmp.ge.s32.totalorder %s35, 2
      %s37 = scalar_select %p36, 0, %s35
      %s38 = ssub.s32 %s25, %s37
      %s39 = ssub.s32 %s26, %s33
      %s40 = sor.u32 %s38, %s39
      %p41 = scmp.eq.s32.totalorder %s40, 0
      %s43 = sadd.s32 %s42, 1
      %s44 = scalar_select %p41, %s42, %s43
      %p47 = pneg %p41
      %p48 = scmp.eq.s32.totalorder %s18, 1
      %p49 = por %p47, %p48
      %p50 = scmp.ne.s32.totalorder %s42, %s45
      %p51 = scmp.eq.s32.totalorder %s18, 0
      %p52 = por %p50, %p51
      %p53 = scmp.ne.s32.totalorder %s42, %s45
      %p54 = scmp.eq.s32.totalorder %s23, 1
      %p55 = por %p53, %p54
      %p56 = scmp.ne.s32.totalorder %s45, %s46
      %p57 = scmp.eq.s32.totalorder %s23, 0
      %p58 = por %p56, %p57
      %p59 = scmp.ne.s32.totalorder %s45, %s46
      %p60 = scmp.eq.s32.totalorder %s24, 1
      %p61 = por %p59, %p60
      %p63 = scmp.ne.s32.totalorder %s46, %s62
      %p64 = scmp.eq.s32.totalorder %s24, 0
      %p65 = por %p63, %p64
      %s66 = ssub.s32 %s25, %s37
      %s67 = ssub.s32 %s26, %s33
      %s68 = sor.u32 %s66, %s67
      %p69 = scmp.eq.s32.totalorder %s68, 0
      %s71 = sadd.s32 %s70, 1
      %s72 = scalar_select %p69, %s70, %s71
      %p75 = pneg %p69
      %p76 = scmp.eq.s32.totalorder %s18, 1
      %p77 = por %p75, %p76
      %p78 = scmp.ne.s32.totalorder %s70, %s73
      %p79 = scmp.eq.s32.totalorder %s18, 0
      %p80 = por %p78, %p79
      %p81 = scmp.ne.s32.totalorder %s70, %s73
      %p82 = scmp.eq.s32.totalorder %s23, 1
      %p83 = por %p81, %p82
      %p84 = scmp.ne.s32.totalorder %s73, %s74
      %p85 = scmp.eq.s32.totalorder %s23, 0
      %p86 = por %p84, %p85
      %p87 = scmp.ne.s32.totalorder %s73, %s74
      %p88 = scmp.eq.s32.totalorder %s24, 1
      %p89 = por %p87, %p88
      %p91 = scmp.ne.s32.totalorder %s74, %s90
      %p92 = scmp.eq.s32.totalorder %s24, 0
      %p93 = por %p91, %p92
      %s94 = ssub.s32 %s25, %s37
      %s95 = ssub.s32 %s26, %s33
      %s96 = sor.u32 %s94, %s95
      %p97 = scmp.eq.s32.totalorder %s96, 0
      %s99 = sadd.s32 %s98, 1
      %s100 = scalar_select %p97, %s98, %s99
      %p103 = pneg %p97
      %p104 = scmp.eq.s32.totalorder %s18, 1
      %p105 = por %p103, %p104
      %p106 = scmp.ne.s32.totalorder %s98, %s101
      %p107 = scmp.eq.s32.totalorder %s18, 0
      %p108 = por %p106, %p107
      %p109 = scmp.ne.s32.totalorder %s98, %s101
      %p110 = scmp.eq.s32.totalorder %s23, 1
      %p111 = por %p109, %p110
      %p112 = scmp.ne.s32.totalorder %s101, %s102
      %p113 = scmp.eq.s32.totalorder %s23, 0
      %p114 = por %p112, %p113
      %p115 = scmp.ne.s32.totalorder %s101, %s102
      %p116 = scmp.eq.s32.totalorder %s24, 1
      %p117 = por %p115, %p116
      %p119 = scmp.ne.s32.totalorder %s102, %s118
      %p120 = scmp.eq.s32.totalorder %s24, 0
      %p121 = por %p119, %p120
      %s122 = ssub.s32 %s25, %s37
      %s123 = ssub.s32 %s26, %s33
      %s124 = sor.u32 %s122, %s123
      %p125 = scmp.eq.s32.totalorder %s124, 0
      %s127 = sadd.s32 %s126, 1
      %s128 = scalar_select %p125, %s126, %s127
      %p131 = pneg %p125
      %p132 = scmp.eq.s32.totalorder %s18, 1
      %p133 = por %p131, %p132
      %p134 = scmp.ne.s32.totalorder %s126, %s129
      %p135 = scmp.eq.s32.totalorder %s18, 0
      %p136 = por %p134, %p135
      %p137 = scmp.ne.s32.totalorder %s126, %s129
      %p138 = scmp.eq.s32.totalorder %s23, 1
      %p139 = por %p137, %p138
      %p140 = scmp.ne.s32.totalorder %s129, %s130
      %p141 = scmp.eq.s32.totalorder %s23, 0
      %p142 = por %p140, %p141
      %p143 = scmp.ne.s32.totalorder %s129, %s130
      %p144 = scmp.eq.s32.totalorder %s24, 1
      %p145 = por %p143, %p144
      %p147 = scmp.ne.s32.totalorder %s130, %s146
      %p148 = scmp.eq.s32.totalorder %s24, 0
      %p149 = por %p147, %p148
      %p150 = scmp.le.s32.totalorder 1, %s18
      %p151 = scmp.lt.s32.totalorder %s18, 3
      %p152 = pnand %p150, %p151
      %p153 = pneg %p152
      // Predicated region
      $region9: #{tpu_custom_call.1} parent=5 // pred_check
        _
      $region10: #{tpu_custom_call.1} parent=5 // pred_check_branch
        %155 = sbr.rel (%p152) target = $region12
      $region11: #{tpu_custom_call.1} parent=5 // pred_region
        %s156 = ssub.s32 %s18, 1
      $region12: #{tpu_custom_call.1} parent=5 // pred_fallthru
        _
      %p157 = scmp.lt.s32.totalorder %s18, 2
      // Predicated region
      $region13: #{tpu_custom_call.1} parent=5 // pred_check
        %p158 = pneg %p157
      $region14: #{tpu_custom_call.1} parent=5 // pred_check_branch
        %160 = sbr.rel (%p158) target = $region16
      $region15: #{tpu_custom_call.1} parent=5 // pred_region
        // Predicated region
        $region17: #{tpu_custom_call.1} parent=15 // pred_check
          %p161 = pneg %p52
        $region18: #{tpu_custom_call.1} parent=15 // pred_check_branch
          %163 = sbr.rel (%p161) target = $region20
        $region19: #{tpu_custom_call.1} parent=15 // pred_region
          %s164 = sand.u32 %s42, 1
          %s165 = scalar_lea.sflag [#allocation5], %s164
          %s166 = sand.u32 %s42, 1
          %s167 = smul.addr %s166, 16
          %s168 = scalar_lea.vmem [#allocation4], %s167
          %s169 = smul.u32 8, %s26
          %171 = vsyncadd %s165, 0
          %s172 = smul.addr %s25, 8
          %s173 = sadd.s32 %s169, %s172
          %s174 = smul.addr %s173, 2
          %s175 = scalar_lea.hbm %s0, %s174
          %s176 = sshll.u32 %s175, 4
          %s177 = int_to_ptr.hbm [resolvable:$true] %s176
          %s178 = sshll.u32 %s168, 4
          %s179 = int_to_ptr.vmem [resolvable:$true] %s178
          %184 = dma.hbm_to_vmem [thread:$0]  %s177, 256, %s179, %s165, 32, 32, 2
        $region20: #{tpu_custom_call.1} parent=15 // pred_fallthru
          _
        // Predicated region
        $region21: #{tpu_custom_call.1} parent=15 // pred_check
          %p185 = pneg %p80
        $region22: #{tpu_custom_call.1} parent=15 // pred_check_branch
          %187 = sbr.rel (%p185) target = $region24
        $region23: #{tpu_custom_call.1} parent=15 // pred_region
          %s188 = sand.u32 %s18, 1
          %s189 = scalar_lea.sflag [#allocation8], %s188
          %s190 = sand.u32 %s70, 1
          %s191 = smul.addr %s190, 16
          %s192 = scalar_lea.vmem [#allocation7], %s191
          %s193 = smul.u32 8, %s26
          %195 = vsyncadd %s189, 0
          %s196 = smul.addr %s25, 8
          %s197 = sadd.s32 %s193, %s196
          %s198 = smul.addr %s197, 2
          %s199 = scalar_lea.hbm %s1, %s198
          %s200 = sshll.u32 %s199, 4
          %s201 = int_to_ptr.hbm [resolvable:$true] %s200
          %s202 = sshll.u32 %s192, 4
          %s203 = int_to_ptr.vmem [resolvable:$true] %s202
          %208 = dma.hbm_to_vmem [thread:$0]  %s201, 256, %s203, %s189, 32, 32, 2
        $region24: #{tpu_custom_call.1} parent=15 // pred_fallthru
          _
        // Predicated region
        $region25: #{tpu_custom_call.1} parent=15 // pred_check
          %p209 = pneg %p108
        $region26: #{tpu_custom_call.1} parent=15 // pred_check_branch
          %211 = sbr.rel (%p209) target = $region28
        $region27: #{tpu_custom_call.1} parent=15 // pred_region
          %s212 = sand.u32 %s18, 1
          %s213 = scalar_lea.sflag [#allocation8], %s212
          %s214 = sand.u32 %s98, 1
          %s215 = smul.addr %s214, 16
          %s216 = scalar_lea.vmem [#allocation9], %s215
          %s217 = smul.u32 8, %s26
          %219 = vsyncadd %s213, 0
          %s220 = smul.addr %s25, 8
          %s221 = sadd.s32 %s217, %s220
          %s222 = smul.addr %s221, 2
          %s223 = scalar_lea.hbm %s2, %s222
          %s224 = sshll.u32 %s223, 4
          %s225 = int_to_ptr.hbm [resolvable:$true] %s224
          %s226 = sshll.u32 %s216, 4
          %s227 = int_to_ptr.vmem [resolvable:$true] %s226
          %232 = dma.hbm_to_vmem [thread:$0]  %s225, 256, %s227, %s213, 32, 32, 2
        $region28: #{tpu_custom_call.1} parent=15 // pred_fallthru
          _
      $region16: #{tpu_custom_call.1} parent=5 // pred_fallthru
        _
      %p233 = scmp.le.s32.totalorder 1, %s18
      %p234 = scmp.lt.s32.totalorder %s18, 3
      %p235 = pnand %p233, %p234
      %p236 = pneg %p235
      // Predicated region
      $region29: #{tpu_custom_call.1} parent=5 // pred_check
        _
      $region30: #{tpu_custom_call.1} parent=5 // pred_check_branch
        %238 = sbr.rel (%p235) target = $region32
      $region31: #{tpu_custom_call.1} parent=5 // pred_region
        %s239 = ssub.s32 %s18, 1
        %s240 = sand.u32 %s45, 1
        %s241 = scalar_lea.sflag [#allocation5], %s240
        %s242 = sand.u32 %s45, 1
        %s243 = smul.addr %s242, 16
        %s244 = scalar_lea.vmem [#allocation4], %s243
        // Predicated region
        $region33: #{tpu_custom_call.1} parent=31 // pred_check
          %p245 = pneg %p58
        $region34: #{tpu_custom_call.1} parent=31 // pred_check_branch
          %247 = sbr.rel (%p245) target = $region36
        $region35: #{tpu_custom_call.1} parent=31 // pred_region
          %249 = dma.done %s241, 256
        $region36: #{tpu_custom_call.1} parent=31 // pred_fallthru
          _
        %s250 = sand.u32 %s23, 1
        %s251 = scalar_lea.sflag [#allocation8], %s250
        %s252 = sand.u32 %s73, 1
        %s253 = smul.addr %s252, 16
        %s254 = scalar_lea.vmem [#allocation7], %s253
        // Predicated region
        $region37: #{tpu_custom_call.1} parent=31 // pred_check
          %p255 = pneg %p86
        $region38: #{tpu_custom_call.1} parent=31 // pred_check_branch
          %257 = sbr.rel (%p255) target = $region40
        $region39: #{tpu_custom_call.1} parent=31 // pred_region
          %259 = dma.done %s251, 256
        $region40: #{tpu_custom_call.1} parent=31 // pred_fallthru
          _
        %s260 = sand.u32 %s23, 1
        %s261 = scalar_lea.sflag [#allocation8], %s260
        %s262 = sand.u32 %s101, 1
        %s263 = smul.addr %s262, 16
        %s264 = scalar_lea.vmem [#allocation9], %s263
        // Predicated region
        $region41: #{tpu_custom_call.1} parent=31 // pred_check
          %p265 = pneg %p114
        $region42: #{tpu_custom_call.1} parent=31 // pred_check_branch
          %267 = sbr.rel (%p265) target = $region44
        $region43: #{tpu_custom_call.1} parent=31 // pred_region
          %269 = dma.done %s261, 256
        $region44: #{tpu_custom_call.1} parent=31 // pred_fallthru
          _
        %s270 = sand.u32 %s45, 1
        %s271 = scalar_lea.sflag [#allocation5], %s270
        %s272 = sand.u32 %s45, 1
        %s273 = smul.addr %s272, 16
        %s274 = scalar_lea.vmem [#allocation4], %s273
        %p275 = pneg %p58
        %p276 = pneg %p55
        %s277 = sand.u32 %s23, 1
        %s278 = scalar_lea.sflag [#allocation8], %s277
        %s279 = sand.u32 %s73, 1
        %s280 = smul.addr %s279, 16
        %s281 = scalar_lea.vmem [#allocation7], %s280
        %p282 = pneg %p86
        %p283 = pneg %p83
        %s284 = sand.u32 %s23, 1
        %s285 = scalar_lea.sflag [#allocation8], %s284
        %s286 = sand.u32 %s101, 1
        %s287 = smul.addr %s286, 16
        %s288 = scalar_lea.vmem [#allocation9], %s287
        %p289 = pneg %p114
        %p290 = pneg %p111
        %p291 = pneg %p142
        %p292 = pneg %p139
        %s293 = sand.u32 %s129, 1
        %s294 = scalar_lea.sflag [#allocation6], %s293
        %s295 = sand.u32 %s129, 1
        %s296 = smul.addr %s295, 16
        %s297 = scalar_lea.vmem [#allocation10], %s296
        %s298 = smul.u32 8, %s28
        %s299 = smul.u32 8, %s28
        %s300 = smul.u32 8, %s28
        %s301 = smul.u32 8, %s28
        %p303 = scmp.eq.s32.totalorder %s28, 0
        // Predicated region
        $region45: #{tpu_custom_call.1} parent=31 // pred_check
          %p304 = pneg %p303
        $region46: #{tpu_custom_call.1} parent=31 // pred_check_branch
          %306 = sbr.rel (%p304) target = $region48
        $region47: #{tpu_custom_call.1} parent=31 // pred_region
          %vm307 = vcmask 261120
          %308 = vst.msk [vmem:[#allocation2] sm:$0xff] %vm307, 0.0
          %309 = vst.msk [vmem:[#allocation2 + $0x8] sm:$0xff] %vm307, 0.0
          %310 = vst.msk [vmem:[#allocation2 + $0x10] sm:$0xff] %vm307, 0.0
          %311 = vst.msk [vmem:[#allocation2 + $0x18] sm:$0xff] %vm307, 0.0
          %312 = vst.msk [vmem:[#allocation2 + $0x20] sm:$0xff] %vm307, 0.0
          %313 = vst.msk [vmem:[#allocation2 + $0x28] sm:$0xff] %vm307, 0.0
          %314 = vst.msk [vmem:[#allocation2 + $0x30] sm:$0xff] %vm307, 0.0
          %315 = vst.msk [vmem:[#allocation2 + $0x38] sm:$0xff] %vm307, 0.0
          %vm316 = vcmask 254976
          %317 = vst.msk [vmem:[#allocation3] sm:$0x3] %vm316, 0.0
        $region48: #{tpu_custom_call.1} parent=31 // pred_fallthru
          _
        %v318 = vld [vmem:[%s244] sm:$0x3]
        %v319 = vld [vmem:[%s244 + $0x2] sm:$0x3]
        %v320 = vld [vmem:[%s244 + $0x4] sm:$0x3]
        %v321 = vld [vmem:[%s244 + $0x6] sm:$0x3]
        %v322 = vld [vmem:[%s244 + $0x8] sm:$0x3]
        %v323 = vld [vmem:[%s244 + $0xa] sm:$0x3]
        %v324 = vld [vmem:[%s244 + $0xc] sm:$0x3]
        %v325 = vld [vmem:[%s244 + $0xe] sm:$0x3]
        %vm326 = vcmp.gt.f32.partialorder %v318, 0.0
        %vm327 = vcmp.gt.f32.partialorder %v319, 0.0
        %vm328 = vcmp.gt.f32.partialorder %v320, 0.0
        %vm329 = vcmp.gt.f32.partialorder %v321, 0.0
        %vm330 = vcmp.gt.f32.partialorder %v322, 0.0
        %vm331 = vcmp.gt.f32.partialorder %v323, 0.0
        %vm332 = vcmp.gt.f32.partialorder %v324, 0.0
        %vm333 = vcmp.gt.f32.partialorder %v325, 0.0
        %v334 = vadd.f32 %v318, 1.0
        %v335 = vadd.f32 %v319, 1.0
        %v336 = vadd.f32 %v320, 1.0
        %v337 = vadd.f32 %v321, 1.0
        %v338 = vadd.f32 %v322, 1.0
        %v339 = vadd.f32 %v323, 1.0
        %v340 = vadd.f32 %v324, 1.0
        %v341 = vadd.f32 %v325, 1.0
        %v342 = vmul.f32 %v318, 1.442695
        %v343 = vpow.pop %v342
        %v344 = vmul.f32 %v319, 1.442695
        %v345 = vpow.pop %v344
        %v346 = vmul.f32 %v320, 1.442695
        %v347 = vpow.pop %v346
        %v348 = vmul.f32 %v321, 1.442695
        %v349 = vpow.pop %v348
        %v350 = vmul.f32 %v322, 1.442695
        %v351 = vpow.pop %v350
        %v352 = vmul.f32 %v323, 1.442695
        %v353 = vpow.pop %v352
        %v354 = vmul.f32 %v324, 1.442695
        %v355 = vpow.pop %v354
        %v356 = vmul.f32 %v325, 1.442695
        %v357 = vpow.pop %v356
        %v358 = vsel %vm326, %v334, %v343
        %v359 = vsel %vm327, %v335, %v345
        %v360 = vsel %vm328, %v336, %v347
        %v361 = vsel %vm329, %v337, %v349
        %v362 = vsel %vm330, %v338, %v351
        %v363 = vsel %vm331, %v339, %v353
        %v364 = vsel %vm332, %v340, %v355
        %v365 = vsel %vm333, %v341, %v357
        %v366 = vld [vmem:[%s254] sm:$0x3]
        %v367 = vld [vmem:[%s254 + $0x2] sm:$0x3]
        %v368 = vld [vmem:[%s254 + $0x4] sm:$0x3]
        %v369 = vld [vmem:[%s254 + $0x6] sm:$0x3]
        %v370 = vld [vmem:[%s254 + $0x8] sm:$0x3]
        %v371 = vld [vmem:[%s254 + $0xa] sm:$0x3]
        %v372 = vld [vmem:[%s254 + $0xc] sm:$0x3]
        %v373 = vld [vmem:[%s254 + $0xe] sm:$0x3]
        %vm374 = vcmp.gt.f32.partialorder %v366, 0.0
        %vm375 = vcmp.gt.f32.partialorder %v367, 0.0
        %vm376 = vcmp.gt.f32.partialorder %v368, 0.0
        %vm377 = vcmp.gt.f32.partialorder %v369, 0.0
        %vm378 = vcmp.gt.f32.partialorder %v370, 0.0
        %vm379 = vcmp.gt.f32.partialorder %v371, 0.0
        %vm380 = vcmp.gt.f32.partialorder %v372, 0.0
        %vm381 = vcmp.gt.f32.partialorder %v373, 0.0
        %v382 = vadd.f32 %v366, 1.0
        %v383 = vadd.f32 %v367, 1.0
        %v384 = vadd.f32 %v368, 1.0
        %v385 = vadd.f32 %v369, 1.0
        %v386 = vadd.f32 %v370, 1.0
        %v387 = vadd.f32 %v371, 1.0
        %v388 = vadd.f32 %v372, 1.0
        %v389 = vadd.f32 %v373, 1.0
        %v390 = vmul.f32 %v366, 1.442695
        %v391 = vpow.pop %v390
        %v392 = vmul.f32 %v367, 1.442695
        %v393 = vpow.pop %v392
        %v394 = vmul.f32 %v368, 1.442695
        %v395 = vpow.pop %v394
        %v396 = vmul.f32 %v369, 1.442695
        %v397 = vpow.pop %v396
        %v398 = vmul.f32 %v370, 1.442695
        %v399 = vpow.pop %v398
        %v400 = vmul.f32 %v371, 1.442695
        %v401 = vpow.pop %v400
        %v402 = vmul.f32 %v372, 1.442695
        %v403 = vpow.pop %v402
        %v404 = vmul.f32 %v373, 1.442695
        %v405 = vpow.pop %v404
        %v406 = vsel %vm374, %v382, %v391
        %v407 = vsel %vm375, %v383, %v393
        %v408 = vsel %vm376, %v384, %v395
        %v409 = vsel %vm377, %v385, %v397
        %v410 = vsel %vm378, %v386, %v399
        %v411 = vsel %vm379, %v387, %v401
        %v412 = vsel %vm380, %v388, %v403
        %v413 = vsel %vm381, %v389, %v405
        %v414 = vld [vmem:[%s264] sm:$0x3]
        %v415 = vld [vmem:[%s264 + $0x2] sm:$0x3]
        %v416 = vld [vmem:[%s264 + $0x4] sm:$0x3]
        %v417 = vld [vmem:[%s264 + $0x6] sm:$0x3]
        %v418 = vld [vmem:[%s264 + $0x8] sm:$0x3]
        %v419 = vld [vmem:[%s264 + $0xa] sm:$0x3]
        %v420 = vld [vmem:[%s264 + $0xc] sm:$0x3]
        %v421 = vld [vmem:[%s264 + $0xe] sm:$0x3]
        %v422 = vrot.slane %v360, 4
        %vm423 = vcmask 1047556
        %v424 = vsel %vm423, %v422, %v358
        %v426 = vunpack.c.l.s4 1983009808
        %v427 = vunpack.c.0.s8 %v426
        %v428 = vperm.slane %v424, %v427
        %v429 = vrot.slane %v361, 4
        %v430 = vsel %vm423, %v429, %v359
        %v432 = vunpack.c.l.s4 1983009808
        %v433 = vunpack.c.0.s8 %v432
        %v434 = vperm.slane %v430, %v433
        %v435 = vrot.slane %v364, 4
        %v436 = vsel %vm423, %v435, %v362
        %v438 = vunpack.c.l.s4 1983009808
        %v439 = vunpack.c.0.s8 %v438
        %v440 = vperm.slane %v436, %v439
        %v441 = vrot.slane %v365, 4
        %v442 = vsel %vm423, %v441, %v363
        %v444 = vunpack.c.l.s4 1983009808
        %v445 = vunpack.c.0.s8 %v444
        %v446 = vperm.slane %v442, %v445
        %v447 = vrot.slane %v434, 4
        %v448 = vsel %vm423, %v447, %v428
        %v450 = vunpack.c.l.s4 1934713408
        %v451 = vunpack.c.0.s8 %v450
        %v452 = vperm.slane %v448, %v451
        %v453 = vrot.slane %v446, 4
        %v454 = vsel %vm423, %v453, %v440
        %v456 = vunpack.c.l.s4 1934713408
        %v457 = vunpack.c.0.s8 %v456
        %v458 = vperm.slane %v454, %v457
        %v459 = vrot.slane %v458, 4
        %v460 = vsel %vm423, %v459, %v452
        %v461 = vrot.slane %v452, 4
        %v462 = vsel %vm423, %v458, %v461
        %v463 = vrot.slane %v408, 4
        %v464 = vsel %vm423, %v463, %v406
        %v466 = vunpack.c.l.s4 1983009808
        %v467 = vunpack.c.0.s8 %v466
        %v468 = vperm.slane %v464, %v467
        %v469 = vrot.slane %v409, 4
        %v470 = vsel %vm423, %v469, %v407
        %v472 = vunpack.c.l.s4 1983009808
        %v473 = vunpack.c.0.s8 %v472
        %v474 = vperm.slane %v470, %v473
        %v475 = vrot.slane %v412, 4
        %v476 = vsel %vm423, %v475, %v410
        %v478 = vunpack.c.l.s4 1983009808
        %v479 = vunpack.c.0.s8 %v478
        %v480 = vperm.slane %v476, %v479
        %v481 = vrot.slane %v413, 4
        %v482 = vsel %vm423, %v481, %v411
        %v484 = vunpack.c.l.s4 1983009808
        %v485 = vunpack.c.0.s8 %v484
        %v486 = vperm.slane %v482, %v485
        %v487 = vrot.slane %v474, 4
        %v488 = vsel %vm423, %v487, %v468
        %v490 = vunpack.c.l.s4 1934713408
        %v491 = vunpack.c.0.s8 %v490
        %v492 = vperm.slane %v488, %v491
        %v493 = vrot.slane %v486, 4
        %v494 = vsel %vm423, %v493, %v480
        %v496 = vunpack.c.l.s4 1934713408
        %v497 = vunpack.c.0.s8 %v496
        %v498 = vperm.slane %v494, %v497
        %v499 = vrot.slane %v498, 4
        %v500 = vsel %vm423, %v499, %v492
        %v501 = vrot.slane %v492, 4
        %v502 = vsel %vm423, %v498, %v501
        %v503 = vrot.slane %v416, 4
        %v504 = vsel %vm423, %v503, %v414
        %v506 = vunpack.c.l.s4 1983009808
        %v507 = vunpack.c.0.s8 %v506
        %v508 = vperm.slane %v504, %v507
        %v509 = vrot.slane %v417, 4
        %v510 = vsel %vm423, %v509, %v415
        %v512 = vunpack.c.l.s4 1983009808
        %v513 = vunpack.c.0.s8 %v512
        %v514 = vperm.slane %v510, %v513
        %v515 = vrot.slane %v420, 4
        %v516 = vsel %vm423, %v515, %v418
        %v518 = vunpack.c.l.s4 1983009808
        %v519 = vunpack.c.0.s8 %v518
        %v520 = vperm.slane %v516, %v519
        %v521 = vrot.slane %v421, 4
        %v522 = vsel %vm423, %v521, %v419
        %v524 = vunpack.c.l.s4 1983009808
        %v525 = vunpack.c.0.s8 %v524
        %v526 = vperm.slane %v522, %v525
        %v527 = vrot.slane %v514, 4
        %v528 = vsel %vm423, %v527, %v508
        %v530 = vunpack.c.l.s4 1934713408
        %v531 = vunpack.c.0.s8 %v530
        %v532 = vperm.slane %v528, %v531
        %v533 = vrot.slane %v526, 4
        %v534 = vsel %vm423, %v533, %v520
        %v536 = vunpack.c.l.s4 1934713408
        %v537 = vunpack.c.0.s8 %v536
        %v538 = vperm.slane %v534, %v537
        %v539 = vrot.slane %v538, 4
        %v540 = vsel %vm423, %v539, %v532
        %v541 = vrot.slane %v532, 4
        %v542 = vsel %vm423, %v538, %v541
        %v543 = vpack.c.bf16 %v460, %v460
        %v544 = vpack.c.bf16 %v462, %v462
        %v545 = vpack.c.bf16 %v500, %v500
        %v546 = vpack.c.bf16 %v502, %v502
        %v547 = vpack.c.bf16 %v540, %v540
        %v548 = vpack.c.bf16 %v542, %v542
        %v549 = vld [vmem:[#allocation2] sm:$0xff]
        %v550 = vld [vmem:[#allocation2 + $0x8] sm:$0xff]
        %v551 = vld [vmem:[#allocation2 + $0x10] sm:$0xff]
        %v552 = vld [vmem:[#allocation2 + $0x18] sm:$0xff]
        %v553 = vld [vmem:[#allocation2 + $0x20] sm:$0xff]
        %v554 = vld [vmem:[#allocation2 + $0x28] sm:$0xff]
        %v555 = vld [vmem:[#allocation2 + $0x30] sm:$0xff]
        %v556 = vld [vmem:[#allocation2 + $0x38] sm:$0xff]
        %v557 = vld [vmem:[#allocation3] sm:$0x3]
        %vm558 = vcmask 261120
        %v560 = vsel %vm558, %v543, 0
        %v563 = vsel %vm558, %v545, 0
        %565 = vmatpush.bf16.xpose.msra.mxu0 0
        %566 = vmatpush.bf16.xpose.msra.mxu0 0
        %567 = vmatpush.bf16.xpose.msra.mxu0 0
        %568 = vmatpush.bf16.xpose.msra.mxu0 0
        %569 = vmatpush.bf16.xpose.msra.mxu0 0
        %570 = vmatpush.bf16.xpose.msra.mxu0 0
        %571 = vmatpush.bf16.xpose.msra.mxu0 0
        %572 = vmatpush.bf16.xpose.msra.mxu0 %v563
        %573 = vmatmul.bf16.gmra.mxu0 %v560
        %v574 = vpop.f32.mrf.mxu0
        %v575 = vadd.f32 0.0, %v574
        %v576 = vpop.f32.mrf.mxu0
        %577 = vdwg.mxu0
        %v579 = vsel %vm558, %v544, 0
        %v582 = vsel %vm558, %v546, 0
        %584 = vmatpush.bf16.xpose.msra.mxu0 0
        %585 = vmatpush.bf16.xpose.msra.mxu0 0
        %586 = vmatpush.bf16.xpose.msra.mxu0 0
        %587 = vmatpush.bf16.xpose.msra.mxu0 0
        %588 = vmatpush.bf16.xpose.msra.mxu0 0
        %589 = vmatpush.bf16.xpose.msra.mxu0 0
        %590 = vmatpush.bf16.xpose.msra.mxu0 0
        %591 = vmatpush.bf16.xpose.msra.mxu0 %v582
        %592 = vmatmul.bf16.gmra.mxu0 %v579
        %v593 = vpop.f32.mrf.mxu0
        %v594 = vadd.f32 0.0, %v593
        %v595 = vpop.f32.mrf.mxu0
        %596 = vdwg.mxu0
        %v597 = vlaneseq
        %v598 = vshrl.u32 %v597, 7
        %v599 = vlaneseq
        %v600 = vand.u32 %v599, 127
        %vm601 = vcmp.ge.s32.totalorder %v598, %v600
        %v602 = vsel %vm601, 1, 0
        %vm603 = vcmp.eq.s32.totalorder %v602, 1
        %v604 = vsel %vm603, %v575, 0.0
        %v605 = vsel %vm603, %v594, 0.0
        %v606 = vpack.c.bf16 %v549, %v549
        %v607 = vpack.c.bf16 %v550, %v550
        %v608 = vpack.c.bf16 %v551, %v551
        %v609 = vpack.c.bf16 %v552, %v552
        %v610 = vpack.c.bf16 %v553, %v553
        %v611 = vpack.c.bf16 %v554, %v554
        %v612 = vpack.c.bf16 %v555, %v555
        %v613 = vpack.c.bf16 %v556, %v556
        %v614 = vpack.c.bf16 %v604, %v604
        %v615 = vpack.c.bf16 %v605, %v605
        %vm616 = vcmask 64512
        %v618 = vsel %vm616, %v614, 0
        %vm620 = vcmask 1043456
        %v622 = vsel %vm620, %v547, 0
        %624 = vmatpush.bf16.msra.mxu0 0
        %625 = vmatpush.bf16.msra.mxu0 0
        %626 = vmatpush.bf16.msra.mxu0 0
        %627 = vmatpush.bf16.msra.mxu0 0
        %628 = vmatpush.bf16.msra.mxu0 0
        %629 = vmatpush.bf16.msra.mxu0 0
        %630 = vmatpush.bf16.msra.mxu0 0
        %631 = vmatpush.bf16.msra.mxu0 %v622
        %632 = vmatmul.bf16.gmra.mxu0 %v618
        %v633 = vpop.f32.mrf.mxu0
        %v634 = vadd.f32 0.0, %v633
        %v635 = vpop.f32.mrf.mxu0
        %636 = vdwg.mxu0
        %v638 = vsel %vm616, %v615, 0
        %v641 = vsel %vm620, %v548, 0
        %643 = vmatpush.bf16.msra.mxu0 0
        %644 = vmatpush.bf16.msra.mxu0 0
        %645 = vmatpush.bf16.msra.mxu0 0
        %646 = vmatpush.bf16.msra.mxu0 0
        %647 = vmatpush.bf16.msra.mxu0 0
        %648 = vmatpush.bf16.msra.mxu0 0
        %649 = vmatpush.bf16.msra.mxu0 0
        %650 = vmatpush.bf16.msra.mxu0 %v641
        %651 = vmatmul.bf16.gmra.mxu0 %v638
        %v652 = vpop.f32.mrf.mxu0
        %v653 = vadd.f32 0.0, %v652
        %v654 = vpop.f32.mrf.mxu0
        %655 = vdwg.mxu0
        %v657 = vrot.slane %v557, 1
        %v658 = vperm.slane %v557, 0
        %v659 = vperm.slane %v657, 0
        %v662 = vmul.f32 %v460, %v658
        %v663 = vmul.f32 %v462, %v659
        %v664 = vsel %vm558, %v662, 0.0
        %665 = vadd.xlane.f32.xlu0 %v664
        %v666 = vpop.xlane.xlu0 %665
        %v667 = vsel %vm558, %v663, 0.0
        %668 = vadd.xlane.f32.xlu0 %v667
        %v669 = vpop.xlane.xlu0 %668
        %v670 = vsel %vm616, %v604, 0.0
        %671 = vadd.xlane.f32.xlu0 %v670
        %v672 = vpop.xlane.xlu0 %671
        %v673 = vsel %vm616, %v605, 0.0
        %674 = vadd.xlane.f32.xlu0 %v673
        %v675 = vpop.xlane.xlu0 %674
        %v676 = vadd.f32 %v666, %v672
        %v677 = vadd.f32 %v669, %v675
        %v678 = vadd.f32 %v676, 1e-10
        %v679 = vadd.f32 %v677, 1e-10
        %v684 = vunpack.c.l.b16 %v606
        %v685 = vunpack.c.l.b16 %v607
        %v686 = vunpack.c.l.b16 %v608
        %v687 = vunpack.c.l.b16 %v609
        %v688 = vpack.c.b16 %v685, %v684
        %v689 = vpack.c.b16 %v687, %v686
        %692 = vmatpush.bf16.msra.mxu0 0
        %693 = vmatpush.bf16.msra.mxu0 0
        %694 = vmatpush.bf16.msra.mxu0 0
        %695 = vmatpush.bf16.msra.mxu0 0
        %696 = vmatpush.bf16.msra.mxu0 0
        %697 = vmatpush.bf16.msra.mxu0 0
        %698 = vmatpush.bf16.msra.mxu0 %v689
        %699 = vmatpush.bf16.msra.mxu0 %v688
        %700 = vmatmul.bf16.gmra.mxu0 %v560
        %v701 = vpop.f32.mrf.mxu0
        %v702 = vadd.f32 %v634, %v701
        %v703 = vpop.f32.mrf.mxu0
        %704 = vdwg.mxu0
        %v709 = vunpack.c.l.b16 %v610
        %v710 = vunpack.c.l.b16 %v611
        %v711 = vunpack.c.l.b16 %v612
        %v712 = vunpack.c.l.b16 %v613
        %v713 = vpack.c.b16 %v710, %v709
        %v714 = vpack.c.b16 %v712, %v711
        %717 = vmatpush.bf16.msra.mxu0 0
        %718 = vmatpush.bf16.msra.mxu0 0
        %719 = vmatpush.bf16.msra.mxu0 0
        %720 = vmatpush.bf16.msra.mxu0 0
        %721 = vmatpush.bf16.msra.mxu0 0
        %722 = vmatpush.bf16.msra.mxu0 0
        %723 = vmatpush.bf16.msra.mxu0 %v714
        %724 = vmatpush.bf16.msra.mxu0 %v713
        %725 = vmatmul.bf16.gmra.mxu0 %v579
        %v726 = vpop.f32.mrf.mxu0
        %v727 = vadd.f32 %v653, %v726
        %v728 = vpop.f32.mrf.mxu0
        %729 = vdwg.mxu0
        %v730 = vrcp.pop %v678
        %v731 = vrcp.pop %v679
        %v732 = vmul.f32 %v702, %v730
        %v733 = vmul.f32 %v727, %v731
        %v734 = vrot.slane %v732, 4
        %v735 = vsel %vm423, 0.0, %v734
        %v737 = vunpack.c.l.s4 1983009808
        %v738 = vunpack.c.0.s8 %v737
        %v739 = vperm.slane %v732, %v738
        %v741 = vunpack.c.l.s4 1983009808
        %v742 = vunpack.c.0.s8 %v741
        %v743 = vperm.slane %v735, %v742
        %v744 = vrot.slane %v733, 4
        %v745 = vsel %vm423, 0.0, %v744
        %v747 = vunpack.c.l.s4 1983009808
        %v748 = vunpack.c.0.s8 %v747
        %v749 = vperm.slane %v733, %v748
        %v751 = vunpack.c.l.s4 1983009808
        %v752 = vunpack.c.0.s8 %v751
        %v753 = vperm.slane %v745, %v752
        %v754 = vrot.slane %v749, 4
        %v755 = vsel %vm423, %v754, %v739
        %v756 = vrot.slane %v739, 4
        %v757 = vsel %vm423, %v749, %v756
        %v759 = vunpack.c.l.s4 1934713408
        %v760 = vunpack.c.0.s8 %v759
        %v761 = vperm.slane %v755, %v760
        %v763 = vunpack.c.l.s4 1934713408
        %v764 = vunpack.c.0.s8 %v763
        %v765 = vperm.slane %v757, %v764
        %v766 = vrot.slane %v753, 4
        %v767 = vsel %vm423, %v766, %v743
        %v768 = vrot.slane %v743, 4
        %v769 = vsel %vm423, %v753, %v768
        %v771 = vunpack.c.l.s4 1934713408
        %v772 = vunpack.c.0.s8 %v771
        %v773 = vperm.slane %v767, %v772
        %v775 = vunpack.c.l.s4 1934713408
        %v776 = vunpack.c.0.s8 %v775
        %v777 = vperm.slane %v769, %v776
        %v778 = vrot.slane %v761, 4
        %v779 = vsel %vm423, 0.0, %v778
        %v780 = vrot.slane %v765, 4
        %v781 = vsel %vm423, 0.0, %v780
        %v782 = vrot.slane %v773, 4
        %v783 = vsel %vm423, 0.0, %v782
        %v784 = vrot.slane %v777, 4
        %v785 = vsel %vm423, 0.0, %v784
        %vm786 = vcmask 254976
        %787 = vst.msk [vmem:[%s297] sm:$0x3] %vm786, %v761
        %788 = vst.msk [vmem:[%s297 + $0x2] sm:$0x3] %vm786, %v779
        %789 = vst.msk [vmem:[%s297 + $0x4] sm:$0x3] %vm786, %v765
        %790 = vst.msk [vmem:[%s297 + $0x6] sm:$0x3] %vm786, %v781
        %791 = vst.msk [vmem:[%s297 + $0x8] sm:$0x3] %vm786, %v773
        %792 = vst.msk [vmem:[%s297 + $0xa] sm:$0x3] %vm786, %v783
        %793 = vst.msk [vmem:[%s297 + $0xc] sm:$0x3] %vm786, %v777
        %794 = vst.msk [vmem:[%s297 + $0xe] sm:$0x3] %vm786, %v785
        %795 = vxpose.xlu0.c.b16.start [1/8] %v545, 128
        %796 = vxpose.xlu0.c.b16.cont [2/8] 0, 128
        %797 = vxpose.xlu0.c.b16.cont [3/8] 0, 128
        %798 = vxpose.xlu0.c.b16.cont [4/8] 0, 128
        %799 = vxpose.xlu0.c.b16.cont [5/8] 0, 128
        %800 = vxpose.xlu0.c.b16.cont [6/8] 0, 128
        %801 = vxpose.xlu0.c.b16.cont [7/8] 0, 128
        %802 = vxpose.xlu0.c.b16.end [8/8] 0, 128
        %v803 = vpop.trf.xlu0
        %v804 = vpop.trf.xlu0
        %v805 = vpop.trf.xlu0
        %v806 = vpop.trf.xlu0
        %v807 = vpop.trf.xlu0
        %v808 = vpop.trf.xlu0
        %v809 = vpop.trf.xlu0
        %v810 = vpop.trf.xlu0
        %v812 = vsel %vm616, %v803, 0
        %v815 = vsel %vm616, %v804, 0
        %817 = vmatpush.bf16.msra.mxu0 0
        %818 = vmatpush.bf16.msra.mxu0 0
        %819 = vmatpush.bf16.msra.mxu0 0
        %820 = vmatpush.bf16.msra.mxu0 0
        %821 = vmatpush.bf16.msra.mxu0 0
        %822 = vmatpush.bf16.msra.mxu0 0
        %823 = vmatpush.bf16.msra.mxu0 0
        %824 = vmatpush.bf16.msra.mxu0 %v622
        %825 = vmatmul.bf16.gmra.mxu0 %v812
        %v826 = vpop.f32.mrf.mxu0
        %v827 = vadd.f32 0.0, %v826
        %v828 = vpop.f32.mrf.mxu0
        %v829 = vadd.f32 0.0, %v828
        %830 = vmatmul.bf16.gmra.mxu0 %v815
        %v831 = vpop.f32.mrf.mxu0
        %v832 = vadd.f32 0.0, %v831
        %v833 = vpop.f32.mrf.mxu0
        %v834 = vadd.f32 0.0, %v833
        %835 = vdwg.mxu0
        %836 = vxpose.xlu0.c.b16.start [1/8] %v546, 128
        %837 = vxpose.xlu0.c.b16.cont [2/8] 0, 128
        %838 = vxpose.xlu0.c.b16.cont [3/8] 0, 128
        %839 = vxpose.xlu0.c.b16.cont [4/8] 0, 128
        %840 = vxpose.xlu0.c.b16.cont [5/8] 0, 128
        %841 = vxpose.xlu0.c.b16.cont [6/8] 0, 128
        %842 = vxpose.xlu0.c.b16.cont [7/8] 0, 128
        %843 = vxpose.xlu0.c.b16.end [8/8] 0, 128
        %v844 = vpop.trf.xlu0
        %v845 = vpop.trf.xlu0
        %v846 = vpop.trf.xlu0
        %v847 = vpop.trf.xlu0
        %v848 = vpop.trf.xlu0
        %v849 = vpop.trf.xlu0
        %v850 = vpop.trf.xlu0
        %v851 = vpop.trf.xlu0
        %v853 = vsel %vm616, %v844, 0
        %v856 = vsel %vm616, %v845, 0
        %858 = vmatpush.bf16.msra.mxu0 0
        %859 = vmatpush.bf16.msra.mxu0 0
        %860 = vmatpush.bf16.msra.mxu0 0
        %861 = vmatpush.bf16.msra.mxu0 0
        %862 = vmatpush.bf16.msra.mxu0 0
        %863 = vmatpush.bf16.msra.mxu0 0
        %864 = vmatpush.bf16.msra.mxu0 0
        %865 = vmatpush.bf16.msra.mxu0 %v641
        %866 = vmatmul.bf16.gmra.mxu0 %v853
        %v867 = vpop.f32.mrf.mxu0
        %v868 = vadd.f32 0.0, %v867
        %v869 = vpop.f32.mrf.mxu0
        %v870 = vadd.f32 0.0, %v869
        %871 = vmatmul.bf16.gmra.mxu0 %v856
        %v872 = vpop.f32.mrf.mxu0
        %v873 = vadd.f32 0.0, %v872
        %v874 = vpop.f32.mrf.mxu0
        %v875 = vadd.f32 0.0, %v874
        %876 = vdwg.mxu0
        %v877 = vadd.f32 %v549, %v827
        %v878 = vadd.f32 %v550, %v829
        %v879 = vadd.f32 %v551, %v832
        %v880 = vadd.f32 %v552, %v834
        %v881 = vadd.f32 %v553, %v868
        %v882 = vadd.f32 %v554, %v870
        %v883 = vadd.f32 %v555, %v873
        %v884 = vadd.f32 %v556, %v875
        %885 = vst.msk [vmem:[#allocation2] sm:$0xff] %vm558, %v877
        %886 = vst.msk [vmem:[#allocation2 + $0x8] sm:$0xff] %vm558, %v878
        %887 = vst.msk [vmem:[#allocation2 + $0x10] sm:$0xff] %vm558, %v879
        %888 = vst.msk [vmem:[#allocation2 + $0x18] sm:$0xff] %vm558, %v880
        %889 = vst.msk [vmem:[#allocation2 + $0x20] sm:$0xff] %vm558, %v881
        %890 = vst.msk [vmem:[#allocation2 + $0x28] sm:$0xff] %vm558, %v882
        %891 = vst.msk [vmem:[#allocation2 + $0x30] sm:$0xff] %vm558, %v883
        %892 = vst.msk [vmem:[#allocation2 + $0x38] sm:$0xff] %vm558, %v884
        %v893 = vsel %vm558, %v500, 0.0
        %v894 = vrot.slane %v893, 4
        %v895 = vadd.f32 %v893, %v894
        %v896 = vrot.slane %v895, 2
        %v897 = vadd.f32 %v895, %v896
        %v898 = vrot.slane %v897, 1
        %v899 = vadd.f32 %v897, %v898
        %v900 = vsel %vm558, %v502, 0.0
        %v901 = vrot.slane %v900, 4
        %v902 = vadd.f32 %v900, %v901
        %v903 = vrot.slane %v902, 2
        %v904 = vadd.f32 %v902, %v903
        %v905 = vrot.slane %v904, 1
        %v906 = vadd.f32 %v904, %v905
        %vm909 = vcmask 1041409
        %v910 = vsel %vm909, %v906, %v899
        %v912 = vadd.f32 %v557, %v910
        %913 = vst.msk [vmem:[#allocation3] sm:$0x3] %vm786, %v912
        %s914 = sand.u32 %s129, 1
        %s915 = scalar_lea.sflag [#allocation6], %s914
        %s916 = sand.u32 %s129, 1
        %s917 = smul.addr %s916, 16
        %s918 = scalar_lea.vmem [#allocation10], %s917
        // Predicated region
        $region49: #{tpu_custom_call.1} parent=31 // pred_check
          %p919 = pneg %p139
        $region50: #{tpu_custom_call.1} parent=31 // pred_check_branch
          %921 = sbr.rel (%p919) target = $region52
        $region51: #{tpu_custom_call.1} parent=31 // pred_region
          %s922 = smul.u32 8, %s28
          %924 = vsyncadd %s915, 0
          %s925 = smul.addr %s27, 8
          %s926 = sadd.s32 %s922, %s925
          %s927 = smul.addr %s926, 2
          %s928 = scalar_lea.hbm %s3, %s927
          %s929 = sshll.u32 %s918, 4
          %s930 = int_to_ptr.vmem [resolvable:$true] %s929
          %s931 = sshll.u32 %s928, 4
          %s932 = int_to_ptr.hbm [resolvable:$true] %s931
          %937 = dma.vmem_to_hbm [thread:$0]  %s930, 256, %s932, %s915, 32, 32, 2
        $region52: #{tpu_custom_call.1} parent=31 // pred_fallthru
          _
      $region32: #{tpu_custom_call.1} parent=5 // pred_fallthru
        _
      %p938 = scmp.le.s32.totalorder 2, %s18
      // Predicated region
      $region53: #{tpu_custom_call.1} parent=5 // pred_check
        %p939 = pneg %p938
      $region54: #{tpu_custom_call.1} parent=5 // pred_check_branch
        %941 = sbr.rel (%p939) target = $region56
      $region55: #{tpu_custom_call.1} parent=5 // pred_region
        %s942 = ssub.s32 %s18, 2
        // Predicated region
        $region57: #{tpu_custom_call.1} parent=55 // pred_check
          %p943 = pneg %p145
        $region58: #{tpu_custom_call.1} parent=55 // pred_check_branch
          %945 = sbr.rel (%p943) target = $region60
        $region59: #{tpu_custom_call.1} parent=55 // pred_region
          %s946 = sand.u32 %s130, 1
          %s947 = scalar_lea.sflag [#allocation6], %s946
          %s948 = sand.u32 %s130, 1
          %s949 = smul.addr %s948, 16
          %s950 = scalar_lea.vmem [#allocation10], %s949
          %952 = dma.done %s947, 256
        $region60: #{tpu_custom_call.1} parent=55 // pred_fallthru
          _
      $region56: #{tpu_custom_call.1} parent=5 // pred_fallthru
        _
    $region6: #{tpu_custom_call.1} parent=1 // loop_footer
      %s22 = sadd.s32 1, %s18
    $region7: #{tpu_custom_call.1} parent=1 // loop_footer_branch
      %17 = sbr.rel target = $region3
    $region8: #{tpu_custom_call.1} parent=1 // loop_exit
      _
    %953 = vsyncpa [#allocation5], 1
    %s954 = scalar_lea.sflag [#allocation5], 1
    %955 = vsyncpa %s954, 1
    %956 = vsyncpa [#allocation8], 1
    %s957 = scalar_lea.sflag [#allocation8], 1
    %958 = vsyncpa %s957, 1
    %959 = vsyncpa [#allocation6], 1
    %s960 = scalar_lea.sflag [#allocation6], 1
    %961 = vsyncpa %s960, 1

</llo_original>
